<compile_context>
chip_gen: v7x
topology: tpu7x:2x2x1
jax: 0.10.0
libtpu: 0.0.40
codegen_flags: <defaults>
</compile_context>

<pallas_src>
import functools
import math

import jax
import jax.numpy as jnp
from jax import lax
from jax.experimental import pallas as pl
from jax.experimental.pallas import tpu as pltpu

# contract last dim of lhs with last dim of rhs (the q @ k.T pattern)
_TRANS_B = (((1,), (1,)), ((), ()))


def _lr_kernel(cs, nc, x_ref, w1_ref, b1_ref, w2_ref, b2_ref, w3_ref, b3_ref,
               o_ref):
    """One batch tile, lane-packed.

    P = number of original rows packed into one 128-lane row (128 // dim).
      x_ref  : (tm/P, P*D)   lane-dense packed activations (bf16 or f32)
      w1_ref : (P*H1, P*D)   block-diagonal fc_1 weight (same dtype as x)
      b1_ref : (P*H1, 1)     f32
      w2_ref : (P*H2, P*H1)  block-diagonal fc_2 weight, f32
      b2_ref : (P*H2, 1)     f32
      w3_ref : (P, P*H2)     fc_3 row folded into a per-slot reduction matrix
      b3_ref : (P, 1)        f32
      o_ref  : (P, tm/P)     lane-dense packed output, f32
    """
    w1 = w1_ref[...]
    b1 = b1_ref[...]
    w2 = w2_ref[...]
    b2 = b2_ref[...]
    w3 = w3_ref[...]
    b3 = b3_ref[...]

    # Fully-unrolled chunk loop with static, lane-aligned offsets: bounds the
    # live range of the per-chunk intermediates (h1, h2) so they never spill
    # as whole-tile VMEM temporaries, while keeping every store unmasked.
    for c in range(nc):
        lo, hi = c * cs, (c + 1) * cs
        xc = x_ref[lo:hi, :]                                   # (cs, P*D)

        # fc_1 + ReLU: (P*H1, P*D) x (cs, P*D)^T -> (P*H1, cs); batch on lanes.
        h1 = lax.dot_general(w1, xc, _TRANS_B,
                             preferred_element_type=jnp.float32)
        h1 = jnp.maximum(h1 + b1, 0.0)
        # dropout = identity (eval mode)

        # fc_2 + ReLU: (P*H2, P*H1) x (P*H1, cs) -> (P*H2, cs)
        h2 = jnp.dot(w2, h1, preferred_element_type=jnp.float32)
        h2 = jnp.maximum(h2 + b2, 0.0)
        # dropout = identity (eval mode)

        # fc_3 (width-1 head) folded into a per-slot reduction: (P, cs)
        out = jnp.dot(w3, h2, preferred_element_type=jnp.float32) + b3
        o_ref[:, lo:hi] = out.astype(o_ref.dtype)


def _packing_factor(N, D):
    """How many original rows to pack into one 128-lane row."""
    if D < 128 and 128 % D == 0 and N % (128 // D) == 0:
        return 128 // D
    return 1


def _pack_params(params, P, x_dtype):
    """Build block-diagonal / tiled parameters for the lane-packed kernel."""
    w1, b1, w2, b2, w3, b3 = params
    H1, D = w1.shape
    H2 = w2.shape[0]
    if P == 1:
        w1_big, w2_big = w1, w2
        b1_big, b2_big = b1, b2
        w3r = w3.T                          # (1, H2)
        b3_big = b3                         # (1, 1)
    else:
        eye = jnp.eye(P, dtype=jnp.float32)
        # W_big[p*H + h, q*K + k] = W[h, k] if p == q else 0
        w1_big = jnp.einsum("pq,hd->phqd", eye, w1).reshape(P * H1, P * D)
        w2_big = jnp.einsum("pq,gh->pgqh", eye, w2).reshape(P * H2, P * H1)
        b1_big = jnp.tile(b1, (P, 1))
        b2_big = jnp.tile(b2, (P, 1))
        # W3R[p, q*H2 + g] = w3[g] if p == q else 0  (fc_3 + slot de-interleave)
        w3r = jnp.einsum("pq,g->pqg", eye, w3[:, 0]).reshape(P, P * H2)
        b3_big = jnp.tile(b3, (P, 1))       # (P, 1)
    return (w1_big.astype(x_dtype),          # streamed with x -> match dtype
            b1_big.astype(jnp.float32),      # bias/ReLU stay f32 (v5e VPU)
            w2_big.astype(jnp.float32),
            b2_big.astype(jnp.float32),
            w3r.astype(jnp.float32),
            b3_big.astype(jnp.float32))


def _choose_tm(N, tm_req, P):
    """Pick a batch tile: lane-aligned, divides N, and >= 2 grid steps."""
    unit = 128 * P                     # smallest lane-aligned batch tile
    if N % unit != 0:
        return N                       # single full-batch tile (small N)
    tm = max(unit, (min(tm_req, N) // unit) * unit)
    while N % tm != 0:
        tm -= unit
    # Prefer >= 2 grid steps so both v7x TensorCores get work ("parallel" axis).
    if tm == N and (N // 2) % unit == 0:
        tm = N // 2
    return tm


def lr_forward(x, params, *, tm=16384, chunk=2048, x_dtype=jnp.bfloat16,
               vmem_limit_bytes=48 * 1024 * 1024, x_buffers=None):
    """x: [N, dim] float32 -> [N] float32 (matches LR.forward(x).squeeze(1)).

    tm:      batch rows per grid step.  16384 default; raise on v5e/v6e,
             keep moderate on v7x (64 MiB VMEM) -- with bf16 packing even
             tm=65536 only needs ~8 MiB of x buffers.
    chunk:   batch rows per in-kernel compute chunk (bounds intermediates).
    x_dtype: dtype of the streamed x / W1 (bf16 halves HBM traffic; f32 for
             bit-accurate checking).  Accumulation is always f32.
    """
    N, D = x.shape
    P = _packing_factor(N, D)
    # NOTE: in a real deployment pack the weights once, not per call.
    w1p, b1p, w2p, b2p, w3r, b3p = _pack_params(params, P, x_dtype)

    tm = _choose_tm(N, tm, P)
    assert N % tm == 0 and tm % P == 0
    tmP = tm // P
    PD = P * D
    PH1, PH2 = w1p.shape[0], w2p.shape[0]

    # Free row-major repack: row i of xp = original rows [P*i, P*i + P).
    xp = x.astype(x_dtype).reshape(N // P, PD)

    # In-kernel chunking (in packed rows); fall back to a single chunk.
    cs_req = max(1, chunk // P)
    cs = cs_req if (0 < cs_req < tmP and tmP % cs_req == 0) else tmP
    nc = tmP // cs

    x_spec_kwargs = {}
    if x_buffers is not None:           # e.g. 3 on v7x if DMA is still exposed
        x_spec_kwargs["pipeline_mode"] = pl.Buffered(x_buffers)

    out_packed = pl.pallas_call(
        functools.partial(_lr_kernel, cs, nc),
        out_shape=jax.ShapeDtypeStruct((P, N // P), jnp.float32),
        grid_spec=pltpu.PrefetchScalarGridSpec(
            num_scalar_prefetch=0,
            grid=(N // tm,),
            in_specs=[
                pl.BlockSpec((tmP, PD), lambda i: (i, 0), **x_spec_kwargs),
                pl.BlockSpec((PH1, PD), lambda i: (0, 0)),    # W1 (resident)
                pl.BlockSpec((PH1, 1), lambda i: (0, 0)),     # b1
                pl.BlockSpec((PH2, PH1), lambda i: (0, 0)),   # W2 (resident)
                pl.BlockSpec((PH2, 1), lambda i: (0, 0)),     # b2
                pl.BlockSpec((P, PH2), lambda i: (0, 0)),     # W3 reduction mat
                pl.BlockSpec((P, 1), lambda i: (0, 0)),       # b3
            ],
            out_specs=pl.BlockSpec((P, tmP), lambda i: (0, i)),  # lane-dense
        ),
        compiler_params=pltpu.CompilerParams(
            dimension_semantics=("parallel",),
            vmem_limit_bytes=vmem_limit_bytes,
        ),
    )(xp, w1p, b1p, w2p, b2p, w3r, b3p)

    # (P, N/P) packed -> (N,): column i holds original rows [P*i, P*i + P).
    return out_packed.T.reshape(N)


def init_params(key, dim):
    """PyTorch-Linear-equivalent init; weights [out,in], biases as [out,1]."""
    h1, h2 = dim // 2, dim // 4
    ks = jax.random.split(key, 6)

    def linear(kw, kb, fan_in, fan_out):
        bound = 1.0 / math.sqrt(fan_in)
        w = jax.random.uniform(kw, (fan_out, fan_in), jnp.float32, -bound, bound)
        b = jax.random.uniform(kb, (fan_out, 1), jnp.float32, -bound, bound)
        return w, b

    w1, b1 = linear(ks[0], ks[1], dim, h1)   # (h1, dim), (h1, 1)
    w2, b2 = linear(ks[2], ks[3], h1, h2)    # (h2, h1), (h2, 1)
    w3, b3 = linear(ks[4], ks[5], h2, 1)     # (1, h2),  (1, 1)
    w3 = jnp.transpose(w3)                   # store as (h2, 1) column
    return (w1, b1, w2, b2, w3, b3)


def lr_reference(x, params):
    """Pure-JAX reference matching the PyTorch formulation (eval mode)."""
    w1, b1, w2, b2, w3, b3 = params
    h = jnp.maximum(x @ w1.T + b1[:, 0], 0.0)    # fc_1 + ReLU
    h = jnp.maximum(h @ w2.T + b2[:, 0], 0.0)    # fc_2 + ReLU
    return (h @ w3)[:, 0] + b3[0, 0]             # fc_3 (w3 = fc_3.weight.T), squeeze


if __name__ == "__main__":
    dim = 32        # fc_1: 32->16, fc_2: 16->8, fc_3: 8->1
    N = 2048        # small batch; still exercises 2 grid steps + chunk loop

    key = jax.random.PRNGKey(0)
    kx, kp = jax.random.split(key)
    x = jax.random.normal(kx, (N, dim), jnp.float32)
    params = init_params(kp, dim)
    ref = lr_reference(x, params)

    # f32 path, small tile/chunk: multi-step grid + multi-chunk inner loop,
    # checked tightly against the PyTorch-formulation reference.
    out_f32 = jax.block_until_ready(
        lr_forward(x, params, tm=1024, chunk=512, x_dtype=jnp.float32))
    assert out_f32.shape == (N,), out_f32.shape
    assert jnp.allclose(out_f32, ref, atol=1e-4, rtol=1e-4), float(
        jnp.max(jnp.abs(out_f32 - ref)))

    # Default path: bf16 x stream, big tile (clamped / split for >=2 steps).
    out_bf16 = jax.block_until_ready(lr_forward(x, params))
    assert out_bf16.shape == (N,), out_bf16.shape
    err = float(jnp.max(jnp.abs(out_bf16 - ref)))
    assert err < 5e-2, err

    print("KERNEL_OK")
</pallas_src>

<mosaic_0001>
module attributes {stable_mosaic.version = 11 : i64} {
  func.func @_lr_kernel(%arg0: i32, %arg1: memref<256x128xf32, #tpu.memory_space<vmem>>, %arg2: memref<64x128xf32, #tpu.memory_space<vmem>>, %arg3: memref<64x1xf32, #tpu.memory_space<vmem>>, %arg4: memref<32x64xf32, #tpu.memory_space<vmem>>, %arg5: memref<32x1xf32, #tpu.memory_space<vmem>>, %arg6: memref<4x32xf32, #tpu.memory_space<vmem>>, %arg7: memref<4x1xf32, #tpu.memory_space<vmem>>, %arg8: memref<4x256xf32, #tpu.memory_space<vmem>>) attributes {dimension_semantics = [#tpu.dimension_semantics<parallel>], iteration_bounds = array<i64: 2>, scalar_prefetch = 0 : i64, scratch_operands = 0 : i64, tpu.core_type = #tpu.core_type<tc>, window_params = [{transform_indices = @transform_0, window_bounds = array<i64: 256, 128>}, {pipeline_mode = #tpu.pipeline_mode<synchronous>, transform_indices = @transform_1, window_bounds = array<i64: 64, 128>}, {pipeline_mode = #tpu.pipeline_mode<synchronous>, transform_indices = @transform_2, window_bounds = array<i64: 64, 1>}, {pipeline_mode = #tpu.pipeline_mode<synchronous>, transform_indices = @transform_3, window_bounds = array<i64: 32, 64>}, {pipeline_mode = #tpu.pipeline_mode<synchronous>, transform_indices = @transform_4, window_bounds = array<i64: 32, 1>}, {pipeline_mode = #tpu.pipeline_mode<synchronous>, transform_indices = @transform_5, window_bounds = array<i64: 4, 32>}, {pipeline_mode = #tpu.pipeline_mode<synchronous>, transform_indices = @transform_6, window_bounds = array<i64: 4, 1>}, {transform_indices = @transform_7, window_bounds = array<i64: 4, 256>}]} {
    %c0 = arith.constant 0 : index
    %c0_0 = arith.constant 0 : index
    %0 = vector.load %arg2[%c0, %c0_0] : memref<64x128xf32, #tpu.memory_space<vmem>>, vector<64x128xf32>
    %c0_1 = arith.constant 0 : index
    %c0_2 = arith.constant 0 : index
    %1 = vector.load %arg3[%c0_1, %c0_2] : memref<64x1xf32, #tpu.memory_space<vmem>>, vector<64x1xf32>
    %c0_3 = arith.constant 0 : index
    %c0_4 = arith.constant 0 : index
    %2 = vector.load %arg4[%c0_3, %c0_4] : memref<32x64xf32, #tpu.memory_space<vmem>>, vector<32x64xf32>
    %c0_5 = arith.constant 0 : index
    %c0_6 = arith.constant 0 : index
    %3 = vector.load %arg5[%c0_5, %c0_6] : memref<32x1xf32, #tpu.memory_space<vmem>>, vector<32x1xf32>
    %c0_7 = arith.constant 0 : index
    %c0_8 = arith.constant 0 : index
    %4 = vector.load %arg6[%c0_7, %c0_8] : memref<4x32xf32, #tpu.memory_space<vmem>>, vector<4x32xf32>
    %c0_9 = arith.constant 0 : index
    %c0_10 = arith.constant 0 : index
    %5 = vector.load %arg7[%c0_9, %c0_10] : memref<4x1xf32, #tpu.memory_space<vmem>>, vector<4x1xf32>
    %c0_11 = arith.constant 0 : index
    %c0_12 = arith.constant 0 : index
    %6 = vector.load %arg1[%c0_11, %c0_12] : memref<256x128xf32, #tpu.memory_space<vmem>>, vector<128x128xf32>
    %cst = arith.constant dense<0.000000e+00> : vector<64x128xf32>
    %7 = tpu.matmul %0, %6, %cst {dimension_numbers = #tpu.dot_dimension_numbers<[1], [1], [0], [0], [0, 0, 1, 0], [], []>} : vector<64x128xf32>, vector<128x128xf32>, vector<64x128xf32> -> vector<64x128xf32>
    %8 = vector.broadcast %1 : vector<64x1xf32> to vector<64x128xf32>
    %9 = arith.addf %7, %8 : vector<64x128xf32>
    %cst_13 = arith.constant 0.000000e+00 : f32
    %10 = vector.broadcast %cst_13 : f32 to vector<64x128xf32>
    %11 = arith.maximumf %9, %10 : vector<64x128xf32>
    %cst_14 = arith.constant dense<0.000000e+00> : vector<32x128xf32>
    %12 = tpu.matmul %2, %11, %cst_14 {dimension_numbers = #tpu.dot_dimension_numbers<[1], [0], [0], [1], [0, 0, 1, 1], [], []>} : vector<32x64xf32>, vector<64x128xf32>, vector<32x128xf32> -> vector<32x128xf32>
    %13 = vector.broadcast %3 : vector<32x1xf32> to vector<32x128xf32>
    %14 = arith.addf %12, %13 : vector<32x128xf32>
    %cst_15 = arith.constant 0.000000e+00 : f32
    %15 = vector.broadcast %cst_15 : f32 to vector<32x128xf32>
    %16 = arith.maximumf %14, %15 : vector<32x128xf32>
    %cst_16 = arith.constant dense<0.000000e+00> : vector<4x128xf32>
    %17 = tpu.matmul %4, %16, %cst_16 {dimension_numbers = #tpu.dot_dimension_numbers<[1], [0], [0], [1], [0, 0, 1, 1], [], []>} : vector<4x32xf32>, vector<32x128xf32>, vector<4x128xf32> -> vector<4x128xf32>
    %18 = vector.broadcast %5 : vector<4x1xf32> to vector<4x128xf32>
    %19 = arith.addf %17, %18 : vector<4x128xf32>
    %c0_17 = arith.constant 0 : index
    %c0_18 = arith.constant 0 : index
    %20 = vector.load %arg8[%c0_17, %c0_18] : memref<4x256xf32, #tpu.memory_space<vmem>>, vector<4x128xf32>
    tpu.vector_store %arg8[%c0_17, %c0_18], %19 {strides = array<i32>} : memref<4x256xf32, #tpu.memory_space<vmem>>, vector<4x128xf32>,
    %c128 = arith.constant 128 : index
    %c0_19 = arith.constant 0 : index
    %21 = vector.load %arg1[%c128, %c0_19] : memref<256x128xf32, #tpu.memory_space<vmem>>, vector<128x128xf32>
    %cst_20 = arith.constant dense<0.000000e+00> : vector<64x128xf32>
    %22 = tpu.matmul %0, %21, %cst_20 {dimension_numbers = #tpu.dot_dimension_numbers<[1], [1], [0], [0], [0, 0, 1, 0], [], []>} : vector<64x128xf32>, vector<128x128xf32>, vector<64x128xf32> -> vector<64x128xf32>
    %23 = vector.broadcast %1 : vector<64x1xf32> to vector<64x128xf32>
    %24 = arith.addf %22, %23 : vector<64x128xf32>
    %cst_21 = arith.constant 0.000000e+00 : f32
    %25 = vector.broadcast %cst_21 : f32 to vector<64x128xf32>
    %26 = arith.maximumf %24, %25 : vector<64x128xf32>
    %cst_22 = arith.constant dense<0.000000e+00> : vector<32x128xf32>
    %27 = tpu.matmul %2, %26, %cst_22 {dimension_numbers = #tpu.dot_dimension_numbers<[1], [0], [0], [1], [0, 0, 1, 1], [], []>} : vector<32x64xf32>, vector<64x128xf32>, vector<32x128xf32> -> vector<32x128xf32>
    %28 = vector.broadcast %3 : vector<32x1xf32> to vector<32x128xf32>
    %29 = arith.addf %27, %28 : vector<32x128xf32>
    %cst_23 = arith.constant 0.000000e+00 : f32
    %30 = vector.broadcast %cst_23 : f32 to vector<32x128xf32>
    %31 = arith.maximumf %29, %30 : vector<32x128xf32>
    %cst_24 = arith.constant dense<0.000000e+00> : vector<4x128xf32>
    %32 = tpu.matmul %4, %31, %cst_24 {dimension_numbers = #tpu.dot_dimension_numbers<[1], [0], [0], [1], [0, 0, 1, 1], [], []>} : vector<4x32xf32>, vector<32x128xf32>, vector<4x128xf32> -> vector<4x128xf32>
    %33 = vector.broadcast %5 : vector<4x1xf32> to vector<4x128xf32>
    %34 = arith.addf %32, %33 : vector<4x128xf32>
    %c0_25 = arith.constant 0 : index
    %c128_26 = arith.constant 128 : index
    %35 = vector.load %arg8[%c0_25, %c128_26] : memref<4x256xf32, #tpu.memory_space<vmem>>, vector<4x128xf32>
    tpu.vector_store %arg8[%c0_25, %c128_26], %34 {strides = array<i32>} : memref<4x256xf32, #tpu.memory_space<vmem>>, vector<4x128xf32>,
    return
  }
  func.func @transform_0(%arg0: i32) -> (i32, i32) {
    %c0_i32 = arith.constant 0 : i32
    %c0_i32_0 = arith.constant 0 : i32
    return %arg0, %c0_i32 : i32, i32
  }
  func.func @transform_1(%arg0: i32) -> (i32, i32) {
    %c0_i32 = arith.constant 0 : i32
    %c0_i32_0 = arith.constant 0 : i32
    %c0_i32_1 = arith.constant 0 : i32
    return %c0_i32, %c0_i32_0 : i32, i32
  }
  func.func @transform_2(%arg0: i32) -> (i32, i32) {
    %c0_i32 = arith.constant 0 : i32
    %c0_i32_0 = arith.constant 0 : i32
    %c0_i32_1 = arith.constant 0 : i32
    return %c0_i32, %c0_i32_0 : i32, i32
  }
  func.func @transform_3(%arg0: i32) -> (i32, i32) {
    %c0_i32 = arith.constant 0 : i32
    %c0_i32_0 = arith.constant 0 : i32
    %c0_i32_1 = arith.constant 0 : i32
    return %c0_i32, %c0_i32_0 : i32, i32
  }
  func.func @transform_4(%arg0: i32) -> (i32, i32) {
    %c0_i32 = arith.constant 0 : i32
    %c0_i32_0 = arith.constant 0 : i32
    %c0_i32_1 = arith.constant 0 : i32
    return %c0_i32, %c0_i32_0 : i32, i32
  }
  func.func @transform_5(%arg0: i32) -> (i32, i32) {
    %c0_i32 = arith.constant 0 : i32
    %c0_i32_0 = arith.constant 0 : i32
    %c0_i32_1 = arith.constant 0 : i32
    return %c0_i32, %c0_i32_0 : i32, i32
  }
  func.func @transform_6(%arg0: i32) -> (i32, i32) {
    %c0_i32 = arith.constant 0 : i32
    %c0_i32_0 = arith.constant 0 : i32
    %c0_i32_1 = arith.constant 0 : i32
    return %c0_i32, %c0_i32_0 : i32, i32
  }
  func.func @transform_7(%arg0: i32) -> (i32, i32) {
    %c0_i32 = arith.constant 0 : i32
    %c0_i32_0 = arith.constant 0 : i32
    return %c0_i32, %arg0 : i32, i32
  }
}

</mosaic_0001>

<llo_original>
// kernel: tpu_custom_call.1
$region0: #{tpu_custom_call.1}
  #allocation0 [shape = 'u32[]', space=smem, size = 0x4, offset = 0x4, fixed_abs, tag = 'smem constant byte address 0x4 - core index']
  #allocation1 [shape = 'u32[144,128]{1,0:T(1,128)}', space=vmem, size = 0x12000, scoped, tag = 'internal scratch']
  %s0 = inlined_call_operand.hbm [shape: f32[512,128], index: 0, kind: input, shape index: {}]
  %s1 = inlined_call_operand.vmem [shape: f32[64,128], index: 1, kind: input, shape index: {}]
  %s2 = inlined_call_operand.vmem [shape: f32[64,1], index: 2, kind: input, shape index: {}]
  %s3 = inlined_call_operand.vmem [shape: f32[32,64], index: 3, kind: input, shape index: {}]
  %s4 = inlined_call_operand.vmem [shape: f32[32,1], index: 4, kind: input, shape index: {}]
  %s5 = inlined_call_operand.vmem [shape: f32[4,32], index: 5, kind: input, shape index: {}]
  %s6 = inlined_call_operand.vmem [shape: f32[4,1], index: 6, kind: input, shape index: {}]
  %s7 = inlined_call_operand.hbm [shape: f32[4,512], index: 7, kind: output, shape index: {}]
  %s8 = sld [smem:[#allocation0]]
  $region65: #{tpu_custom_call.1} parent=0
    _
  %s10 = ssub.s32 1, %s8
  %s11 = scalar_select 0, %s10, %s8
  $region1: #{tpu_custom_call.1} parent=0
    #allocation2 [shape = 'u8[262144]{0}', space=vmem, size = 0x40000, scoped, tag = 'input window, operand 0']
    #allocation3 [shape = 's32[2]{0}', space=sflag, size = 0x8, scoped, tag = 'scoped memory for tpu_custom_call.1']
    #allocation4 [shape = 's32[2]{0}', space=sflag, size = 0x8, scoped, tag = 'scoped memory for tpu_custom_call.1']
    #allocation5 [shape = 'u8[8192]{0}', space=vmem, size = 0x2000, scoped, tag = 'output window, operand 0']
    %12 = vsyncpa [#allocation3], 0
    %s13 = scalar_lea.sflag [#allocation3], 1
    %14 = vsyncpa %s13, 0
    %15 = vsyncpa [#allocation4], 0
    %s16 = scalar_lea.sflag [#allocation4], 1
    %17 = vsyncpa %s16, 0
    loop: start=0, step=1, limit=4
    $region2: #{tpu_custom_call.1} parent=1 // loop_pre_header
      _
    $region3: #{tpu_custom_call.1} parent=1 // loop_header
      %s19 = sphi 0, %s23
      %p20 = scmp.ge.s32.totalorder %s19, 4
      %s29 = sphi 0, %s31
      %s32 = sphi 0, %s29
      %s33 = sphi 0, %s32
      %s49 = sphi 0, %s33
      %s53 = sphi 0, %s53
      %s55 = sphi 0, %s53
      %s56 = sphi 0, %s55
      %s70 = sphi 0, %s56
      %s74 = sphi 0, %s74
      %s76 = sphi 0, %s74
      %s77 = sphi 0, %s76
      %s91 = sphi 0, %s77
      %s95 = sphi 0, %s95
      %s97 = sphi 0, %s95
      %s98 = sphi 0, %s97
      %s112 = sphi 0, %s98
      %s116 = sphi 0, %s116
      %s118 = sphi 0, %s116
      %s119 = sphi 0, %s118
      %s133 = sphi 0, %s119
      %s137 = sphi 0, %s137
      %s139 = sphi 0, %s137
      %s140 = sphi 0, %s139
      %s154 = sphi 0, %s140
      %s158 = sphi 0, %s158
      %s160 = sphi 0, %s158
      %s161 = sphi 0, %s160
      %s175 = sphi 0, %s161
      %s181 = sphi 0, %s183
      %s184 = sphi 0, %s181
      %s185 = sphi 0, %s184
      %s201 = sphi 0, %s185
    $region4: #{tpu_custom_call.1} parent=1 // loop_header_branch
      %22 = sbr.rel (%p20) target = $region8
    $region5: #{tpu_custom_call.1} parent=1 // loop_body
      %s24 = ssub.s32 %s19, 1
      %s25 = ssub.s32 %s19, 2
      %s26 = sadd.s32 %s19, 1
      %s27 = ssub.s32 %s19, %s26
      %p28 = scmp.eq.s32.totalorder %s27, 0
      %s30 = sadd.s32 %s29, 1
      %s31 = scalar_select %p28, %s29, %s30
      %p34 = pneg %p28
      %p35 = scmp.eq.s32.totalorder %s19, 1
      %p36 = por %p34, %p35
      %p37 = scmp.ne.s32.totalorder %s29, %s32
      %p38 = scmp.eq.s32.totalorder %s19, 0
      %p39 = por %p37, %p38
      %p40 = scmp.ne.s32.totalorder %s29, %s32
      %p41 = scmp.eq.s32.totalorder %s24, 1
      %p42 = por %p40, %p41
      %p43 = scmp.ne.s32.totalorder %s32, %s33
      %p44 = scmp.eq.s32.totalorder %s24, 0
      %p45 = por %p43, %p44
      %p46 = scmp.ne.s32.totalorder %s32, %s33
      %p47 = scmp.eq.s32.totalorder %s25, 1
      %p48 = por %p46, %p47
      %p50 = scmp.ne.s32.totalorder %s33, %s49
      %p51 = scmp.eq.s32.totalorder %s25, 0
      %p52 = por %p50, %p51
      %s54 = sadd.s32 %s53, 1
      %p57 = scmp.eq.s32.totalorder %s19, 1
      %p58 = scmp.ne.s32.totalorder %s53, %s55
      %p59 = scmp.eq.s32.totalorder %s19, 0
      %p60 = por %p58, %p59
      %p61 = scmp.ne.s32.totalorder %s53, %s55
      %p62 = scmp.eq.s32.totalorder %s24, 1
      %p63 = por %p61, %p62
      %p64 = scmp.ne.s32.totalorder %s55, %s56
      %p65 = scmp.eq.s32.totalorder %s24, 0
      %p66 = por %p64, %p65
      %p67 = scmp.ne.s32.totalorder %s55, %s56
      %p68 = scmp.eq.s32.totalorder %s25, 1
      %p69 = por %p67, %p68
      %p71 = scmp.ne.s32.totalorder %s56, %s70
      %p72 = scmp.eq.s32.totalorder %s25, 0
      %p73 = por %p71, %p72
      %s75 = sadd.s32 %s74, 1
      %p78 = scmp.eq.s32.totalorder %s19, 1
      %p79 = scmp.ne.s32.totalorder %s74, %s76
      %p80 = scmp.eq.s32.totalorder %s19, 0
      %p81 = por %p79, %p80
      %p82 = scmp.ne.s32.totalorder %s74, %s76
      %p83 = scmp.eq.s32.totalorder %s24, 1
      %p84 = por %p82, %p83
      %p85 = scmp.ne.s32.totalorder %s76, %s77
      %p86 = scmp.eq.s32.totalorder %s24, 0
      %p87 = por %p85, %p86
      %p88 = scmp.ne.s32.totalorder %s76, %s77
      %p89 = scmp.eq.s32.totalorder %s25, 1
      %p90 = por %p88, %p89
      %p92 = scmp.ne.s32.totalorder %s77, %s91
      %p93 = scmp.eq.s32.totalorder %s25, 0
      %p94 = por %p92, %p93
      %s96 = sadd.s32 %s95, 1
      %p99 = scmp.eq.s32.totalorder %s19, 1
      %p100 = scmp.ne.s32.totalorder %s95, %s97
      %p101 = scmp.eq.s32.totalorder %s19, 0
      %p102 = por %p100, %p101
      %p103 = scmp.ne.s32.totalorder %s95, %s97
      %p104 = scmp.eq.s32.totalorder %s24, 1
      %p105 = por %p103, %p104
      %p106 = scmp.ne.s32.totalorder %s97, %s98
      %p107 = scmp.eq.s32.totalorder %s24, 0
      %p108 = por %p106, %p107
      %p109 = scmp.ne.s32.totalorder %s97, %s98
      %p110 = scmp.eq.s32.totalorder %s25, 1
      %p111 = por %p109, %p110
      %p113 = scmp.ne.s32.totalorder %s98, %s112
      %p114 = scmp.eq.s32.totalorder %s25, 0
      %p115 = por %p113, %p114
      %s117 = sadd.s32 %s116, 1
      %p120 = scmp.eq.s32.totalorder %s19, 1
      %p121 = scmp.ne.s32.totalorder %s116, %s118
      %p122 = scmp.eq.s32.totalorder %s19, 0
      %p123 = por %p121, %p122
      %p124 = scmp.ne.s32.totalorder %s116, %s118
      %p125 = scmp.eq.s32.totalorder %s24, 1
      %p126 = por %p124, %p125
      %p127 = scmp.ne.s32.totalorder %s118, %s119
      %p128 = scmp.eq.s32.totalorder %s24, 0
      %p129 = por %p127, %p128
      %p130 = scmp.ne.s32.totalorder %s118, %s119
      %p131 = scmp.eq.s32.totalorder %s25, 1
      %p132 = por %p130, %p131
      %p134 = scmp.ne.s32.totalorder %s119, %s133
      %p135 = scmp.eq.s32.totalorder %s25, 0
      %p136 = por %p134, %p135
      %s138 = sadd.s32 %s137, 1
      %p141 = scmp.eq.s32.totalorder %s19, 1
      %p142 = scmp.ne.s32.totalorder %s137, %s139
      %p143 = scmp.eq.s32.totalorder %s19, 0
      %p144 = por %p142, %p143
      %p145 = scmp.ne.s32.totalorder %s137, %s139
      %p146 = scmp.eq.s32.totalorder %s24, 1
      %p147 = por %p145, %p146
      %p148 = scmp.ne.s32.totalorder %s139, %s140
      %p149 = scmp.eq.s32.totalorder %s24, 0
      %p150 = por %p148, %p149
      %p151 = scmp.ne.s32.totalorder %s139, %s140
      %p152 = scmp.eq.s32.totalorder %s25, 1
      %p153 = por %p151, %p152
      %p155 = scmp.ne.s32.totalorder %s140, %s154
      %p156 = scmp.eq.s32.totalorder %s25, 0
      %p157 = por %p155, %p156
      %s159 = sadd.s32 %s158, 1
      %p162 = scmp.eq.s32.totalorder %s19, 1
      %p163 = scmp.ne.s32.totalorder %s158, %s160
      %p164 = scmp.eq.s32.totalorder %s19, 0
      %p165 = por %p163, %p164
      %p166 = scmp.ne.s32.totalorder %s158, %s160
      %p167 = scmp.eq.s32.totalorder %s24, 1
      %p168 = por %p166, %p167
      %p169 = scmp.ne.s32.totalorder %s160, %s161
      %p170 = scmp.eq.s32.totalorder %s24, 0
      %p171 = por %p169, %p170
      %p172 = scmp.ne.s32.totalorder %s160, %s161
      %p173 = scmp.eq.s32.totalorder %s25, 1
      %p174 = por %p172, %p173
      %p176 = scmp.ne.s32.totalorder %s161, %s175
      %p177 = scmp.eq.s32.totalorder %s25, 0
      %p178 = por %p176, %p177
      %s179 = ssub.s32 %s19, %s26
      %p180 = scmp.eq.s32.totalorder %s179, 0
      %s182 = sadd.s32 %s181, 1
      %s183 = scalar_select %p180, %s181, %s182
      %p186 = pneg %p180
      %p187 = scmp.eq.s32.totalorder %s19, 1
      %p188 = por %p186, %p187
      %p189 = scmp.ne.s32.totalorder %s181, %s184
      %p190 = scmp.eq.s32.totalorder %s19, 0
      %p191 = por %p189, %p190
      %p192 = scmp.ne.s32.totalorder %s181, %s184
      %p193 = scmp.eq.s32.totalorder %s24, 1
      %p194 = por %p192, %p193
      %p195 = scmp.ne.s32.totalorder %s184, %s185
      %p196 = scmp.eq.s32.totalorder %s24, 0
      %p197 = por %p195, %p196
      %p198 = scmp.ne.s32.totalorder %s184, %s185
      %p199 = scmp.eq.s32.totalorder %s25, 1
      %p200 = por %p198, %p199
      %p202 = scmp.ne.s32.totalorder %s185, %s201
      %p203 = scmp.eq.s32.totalorder %s25, 0
      %p204 = por %p202, %p203
      %p205 = scmp.le.s32.totalorder 1, %s19
      %p206 = scmp.lt.s32.totalorder %s19, 3
      %p207 = pnand %p205, %p206
      %p208 = pneg %p207
      // Predicated region
      $region9: #{tpu_custom_call.1} parent=5 // pred_check
        _
      $region10: #{tpu_custom_call.1} parent=5 // pred_check_branch
        %210 = sbr.rel (%p207) target = $region12
      $region11: #{tpu_custom_call.1} parent=5 // pred_region
        %s211 = ssub.s32 %s19, 1
        // Predicated region
        $region13: #{tpu_custom_call.1} parent=11 // pred_check
          %p212 = pneg %p66
        $region14: #{tpu_custom_call.1} parent=11 // pred_check_branch
          %214 = sbr.rel (%p212) target = $region16
        $region15: #{tpu_custom_call.1} parent=11 // pred_region
          _
        $region16: #{tpu_custom_call.1} parent=11 // pred_fallthru
          _
        // Predicated region
        $region17: #{tpu_custom_call.1} parent=11 // pred_check
          %p215 = pneg %p87
        $region18: #{tpu_custom_call.1} parent=11 // pred_check_branch
          %217 = sbr.rel (%p215) target = $region20
        $region19: #{tpu_custom_call.1} parent=11 // pred_region
          _
        $region20: #{tpu_custom_call.1} parent=11 // pred_fallthru
          _
        // Predicated region
        $region21: #{tpu_custom_call.1} parent=11 // pred_check
          %p218 = pneg %p108
        $region22: #{tpu_custom_call.1} parent=11 // pred_check_branch
          %220 = sbr.rel (%p218) target = $region24
        $region23: #{tpu_custom_call.1} parent=11 // pred_region
          _
        $region24: #{tpu_custom_call.1} parent=11 // pred_fallthru
          _
        // Predicated region
        $region25: #{tpu_custom_call.1} parent=11 // pred_check
          %p221 = pneg %p129
        $region26: #{tpu_custom_call.1} parent=11 // pred_check_branch
          %223 = sbr.rel (%p221) target = $region28
        $region27: #{tpu_custom_call.1} parent=11 // pred_region
          _
        $region28: #{tpu_custom_call.1} parent=11 // pred_fallthru
          _
        // Predicated region
        $region29: #{tpu_custom_call.1} parent=11 // pred_check
          %p224 = pneg %p150
        $region30: #{tpu_custom_call.1} parent=11 // pred_check_branch
          %226 = sbr.rel (%p224) target = $region32
        $region31: #{tpu_custom_call.1} parent=11 // pred_region
          _
        $region32: #{tpu_custom_call.1} parent=11 // pred_fallthru
          _
        // Predicated region
        $region33: #{tpu_custom_call.1} parent=11 // pred_check
          %p227 = pneg %p171
        $region34: #{tpu_custom_call.1} parent=11 // pred_check_branch
          %229 = sbr.rel (%p227) target = $region36
        $region35: #{tpu_custom_call.1} parent=11 // pred_region
          _
        $region36: #{tpu_custom_call.1} parent=11 // pred_fallthru
          _
      $region12: #{tpu_custom_call.1} parent=5 // pred_fallthru
        _
      %p230 = scmp.lt.s32.totalorder %s19, 2
      // Predicated region
      $region37: #{tpu_custom_call.1} parent=5 // pred_check
        %p231 = pneg %p230
      $region38: #{tpu_custom_call.1} parent=5 // pred_check_branch
        %233 = sbr.rel (%p231) target = $region40
      $region39: #{tpu_custom_call.1} parent=5 // pred_region
        // Predicated region
        $region41: #{tpu_custom_call.1} parent=39 // pred_check
          %p234 = pneg %p39
        $region42: #{tpu_custom_call.1} parent=39 // pred_check_branch
          %236 = sbr.rel (%p234) target = $region44
        $region43: #{tpu_custom_call.1} parent=39 // pred_region
          %s237 = sand.u32 %s29, 1
          %s238 = scalar_lea.sflag [#allocation3], %s237
          %s239 = sand.u32 %s29, 1
          %s240 = smul.addr %s239, 256
          %s241 = scalar_lea.vmem [#allocation2], %s240
          %s242 = smul.u32 32, %s19
          %s244 = ssub.s32 4096, 4096
          %245 = vsyncadd %s238, %s244
          %s246 = smul.addr %s242, 128
          %s247 = scalar_lea.hbm %s0, %s246
          %s248 = sshll.u32 %s241, 4
          %s249 = int_to_ptr.vmem [resolvable:$true] %s248
          %254 = dma.hbm_to_vmem [thread:$0]  %s247, 4096, %s249, %s238, 128, 128, 8
        $region44: #{tpu_custom_call.1} parent=39 // pred_fallthru
          _
      $region40: #{tpu_custom_call.1} parent=5 // pred_fallthru
        _
      %p255 = scmp.le.s32.totalorder 1, %s19
      %p256 = scmp.lt.s32.totalorder %s19, 3
      %p257 = pnand %p255, %p256
      %p258 = pneg %p257
      // Predicated region
      $region45: #{tpu_custom_call.1} parent=5 // pred_check
        _
      $region46: #{tpu_custom_call.1} parent=5 // pred_check_branch
        %260 = sbr.rel (%p257) target = $region48
      $region47: #{tpu_custom_call.1} parent=5 // pred_region
        %s261 = ssub.s32 %s19, 1
        %s262 = sand.u32 %s32, 1
        %s263 = scalar_lea.sflag [#allocation3], %s262
        %s264 = sand.u32 %s32, 1
        %s265 = smul.addr %s264, 256
        %s266 = scalar_lea.vmem [#allocation2], %s265
        // Predicated region
        $region49: #{tpu_custom_call.1} parent=47 // pred_check
          %p267 = pneg %p45
        $region50: #{tpu_custom_call.1} parent=47 // pred_check_branch
          %269 = sbr.rel (%p267) target = $region52
        $region51: #{tpu_custom_call.1} parent=47 // pred_region
          %270 = dma.done %s263, 4096
        $region52: #{tpu_custom_call.1} parent=47 // pred_fallthru
          _
        %s271 = sand.u32 %s32, 1
        %s272 = scalar_lea.sflag [#allocation3], %s271
        %s273 = sand.u32 %s32, 1
        %s274 = smul.addr %s273, 256
        %s275 = scalar_lea.vmem [#allocation2], %s274
        %p276 = pneg %p45
        %p277 = pneg %p42
        %p278 = pneg %p66
        %p279 = pneg %p63
        %p280 = pneg %p87
        %p281 = pneg %p84
        %p282 = pneg %p108
        %p283 = pneg %p105
        %p284 = pneg %p129
        %p285 = pneg %p126
        %p286 = pneg %p150
        %p287 = pneg %p147
        %p288 = pneg %p171
        %p289 = pneg %p168
        %p290 = pneg %p197
        %p291 = pneg %p194
        %s292 = sand.u32 %s184, 1
        %s293 = scalar_lea.sflag [#allocation4], %s292
        %s294 = sand.u32 %s184, 1
        %s295 = smul.addr %s294, 8
        %s296 = scalar_lea.vmem [#allocation5], %s295
        %s297 = smul.u32 32, %s24
        %s298 = smul.u32 2, %s24
        %v299 = vld [vmem:[%s1] sm:$0xff]
        %v300 = vld [vmem:[%s1 + $0x8] sm:$0xff]
        %v301 = vld [vmem:[%s1 + $0x10] sm:$0xff]
        %v302 = vld [vmem:[%s1 + $0x18] sm:$0xff]
        %v303 = vld [vmem:[%s1 + $0x20] sm:$0xff]
        %v304 = vld [vmem:[%s1 + $0x28] sm:$0xff]
        %v305 = vld [vmem:[%s1 + $0x30] sm:$0xff]
        %v306 = vld [vmem:[%s1 + $0x38] sm:$0xff]
        %v307 = vld [vmem:[%s2] sm:$0xff]
        %v308 = vld [vmem:[%s2 + $0x8] sm:$0xff]
        %v309 = vld [vmem:[%s2 + $0x10] sm:$0xff]
        %v310 = vld [vmem:[%s2 + $0x18] sm:$0xff]
        %v311 = vld [vmem:[%s2 + $0x20] sm:$0xff]
        %v312 = vld [vmem:[%s2 + $0x28] sm:$0xff]
        %v313 = vld [vmem:[%s2 + $0x30] sm:$0xff]
        %v314 = vld [vmem:[%s2 + $0x38] sm:$0xff]
        %v315 = vld [vmem:[%s3] sm:$0xff]
        %v316 = vld [vmem:[%s3 + $0x8] sm:$0xff]
        %v317 = vld [vmem:[%s3 + $0x10] sm:$0xff]
        %v318 = vld [vmem:[%s3 + $0x18] sm:$0xff]
        %v319 = vld [vmem:[%s4] sm:$0xff]
        %v320 = vld [vmem:[%s4 + $0x8] sm:$0xff]
        %v321 = vld [vmem:[%s4 + $0x10] sm:$0xff]
        %v322 = vld [vmem:[%s4 + $0x18] sm:$0xff]
        %v323 = vld [vmem:[%s5] sm:$0xf]
        %v324 = vld [vmem:[%s6] sm:$0xf]
        %v325 = vld [vmem:[%s266] sm:$0xff]
        %v326 = vld [vmem:[%s266 + $0x8] sm:$0xff]
        %v327 = vld [vmem:[%s266 + $0x10] sm:$0xff]
        %v328 = vld [vmem:[%s266 + $0x18] sm:$0xff]
        %v329 = vld [vmem:[%s266 + $0x20] sm:$0xff]
        %v330 = vld [vmem:[%s266 + $0x28] sm:$0xff]
        %v331 = vld [vmem:[%s266 + $0x30] sm:$0xff]
        %v332 = vld [vmem:[%s266 + $0x38] sm:$0xff]
        %v333 = vld [vmem:[%s266 + $0x40] sm:$0xff]
        %v334 = vld [vmem:[%s266 + $0x48] sm:$0xff]
        %v335 = vld [vmem:[%s266 + $0x50] sm:$0xff]
        %v336 = vld [vmem:[%s266 + $0x58] sm:$0xff]
        %v337 = vld [vmem:[%s266 + $0x60] sm:$0xff]
        %v338 = vld [vmem:[%s266 + $0x68] sm:$0xff]
        %v339 = vld [vmem:[%s266 + $0x70] sm:$0xff]
        %v340 = vld [vmem:[%s266 + $0x78] sm:$0xff]
        %342 = vset.pattern.permute.xlu0 0
        %343 = vperm.xlu0 %342, %v307
        %v344 = vpop.permute.xlu0 %343
        %347 = vset.pattern.permute.xlu0 0
        %348 = vperm.xlu0 %347, %v308
        %v349 = vpop.permute.xlu0 %348
        %352 = vset.pattern.permute.xlu0 0
        %353 = vperm.xlu0 %352, %v309
        %v354 = vpop.permute.xlu0 %353
        %357 = vset.pattern.permute.xlu0 0
        %358 = vperm.xlu0 %357, %v310
        %v359 = vpop.permute.xlu0 %358
        %362 = vset.pattern.permute.xlu0 0
        %363 = vperm.xlu0 %362, %v311
        %v364 = vpop.permute.xlu0 %363
        %367 = vset.pattern.permute.xlu0 0
        %368 = vperm.xlu0 %367, %v312
        %v369 = vpop.permute.xlu0 %368
        %372 = vset.pattern.permute.xlu0 0
        %373 = vperm.xlu0 %372, %v313
        %v374 = vpop.permute.xlu0 %373
        %377 = vset.pattern.permute.xlu0 0
        %378 = vperm.xlu0 %377, %v314
        %v379 = vpop.permute.xlu0 %378
        %381 = vmatprep.subr.mxu0 0.0
        %382 = vmatpush1.xpose.msra.mxu0 %v325
        %383 = vmatprep.subr.mxu0 0.0
        %384 = vmatpush1.xpose.msra.mxu0 %v326
        %385 = vmatprep.subr.mxu0 0.0
        %386 = vmatpush1.xpose.msra.mxu0 %v327
        %387 = vmatprep.subr.mxu0 0.0
        %388 = vmatpush1.xpose.msra.mxu0 %v328
        %389 = vmatprep.subr.mxu0 0.0
        %390 = vmatpush1.xpose.msra.mxu0 %v329
        %391 = vmatprep.subr.mxu0 0.0
        %392 = vmatpush1.xpose.msra.mxu0 %v330
        %393 = vmatprep.subr.mxu0 0.0
        %394 = vmatpush1.xpose.msra.mxu0 %v331
        %395 = vmatprep.subr.mxu0 0.0
        %396 = vmatpush1.xpose.msra.mxu0 %v332
        %397 = vmatprep.subr.mxu0 0.0
        %398 = vmatpush1.xpose.msra.mxu0 %v333
        %399 = vmatprep.subr.mxu0 0.0
        %400 = vmatpush1.xpose.msra.mxu0 %v334
        %401 = vmatprep.subr.mxu0 0.0
        %402 = vmatpush1.xpose.msra.mxu0 %v335
        %403 = vmatprep.subr.mxu0 0.0
        %404 = vmatpush1.xpose.msra.mxu0 %v336
        %405 = vmatprep.subr.mxu0 0.0
        %406 = vmatpush1.xpose.msra.mxu0 %v337
        %407 = vmatprep.subr.mxu0 0.0
        %408 = vmatpush1.xpose.msra.mxu0 %v338
        %409 = vmatprep.subr.mxu0 0.0
        %410 = vmatpush1.xpose.msra.mxu0 %v339
        %411 = vmatprep.subr.mxu0 0.0
        %412 = vmatpush1.xpose.msra.mxu0 %v340
        %413 = vmatprep.subr.mxu0 0.0
        %414 = vmatpush1.xpose.msra.mxu0 0.0
        %415 = vmatprep.subr.mxu0 0.0
        %416 = vmatpush1.xpose.msra.mxu0 0.0
        %417 = vmatprep.subr.mxu0 0.0
        %418 = vmatpush1.xpose.msra.mxu0 0.0
        %419 = vmatprep.subr.mxu0 0.0
        %420 = vmatpush1.xpose.msra.mxu0 0.0
        %421 = vmatprep.subr.mxu0 0.0
        %422 = vmatpush1.xpose.msra.mxu0 0.0
        %423 = vmatprep.subr.mxu0 0.0
        %424 = vmatpush1.xpose.msra.mxu0 0.0
        %425 = vmatprep.subr.mxu0 0.0
        %426 = vmatpush1.xpose.msra.mxu0 0.0
        %427 = vmatprep.subr.mxu0 0.0
        %428 = vmatpush1.xpose.msra.mxu0 0.0
        %429 = vmatprep.subr.mxu0 0.0
        %430 = vmatpush1.xpose.msra.mxu0 0.0
        %431 = vmatprep.subr.mxu0 0.0
        %432 = vmatpush1.xpose.msra.mxu0 0.0
        %433 = vmatprep.subr.mxu0 0.0
        %434 = vmatpush1.xpose.msra.mxu0 0.0
        %435 = vmatprep.subr.mxu0 0.0
        %436 = vmatpush1.xpose.msra.mxu0 0.0
        %437 = vmatprep.subr.mxu0 0.0
        %438 = vmatpush1.xpose.msra.mxu0 0.0
        %439 = vmatprep.subr.mxu0 0.0
        %440 = vmatpush1.xpose.msra.mxu0 0.0
        %441 = vmatprep.subr.mxu0 0.0
        %442 = vmatpush1.xpose.msra.mxu0 0.0
        %443 = vmatprep.subr.mxu0 0.0
        %444 = vmatpush1.xpose.msra.mxu0 0.0
        %445 = vmatprep.mubr.f32.mxu0 0.0
        %446 = vmatmul.mubr.f32.gmra.mrb[0].mxu0 %v299
        %v447 = vpop.f32.mrb[0].mxu0
        %v448 = vadd.f32 %v344, %v447
        %v449 = vpop.f32.mrb[0].mxu0
        %450 = vmatprep.mubr.f32.mxu0 0.0
        %451 = vmatmul.mubr.f32.gmra.mrb[0].mxu0 %v300
        %v452 = vpop.f32.mrb[0].mxu0
        %v453 = vadd.f32 %v349, %v452
        %v454 = vpop.f32.mrb[0].mxu0
        %455 = vmatprep.mubr.f32.mxu0 0.0
        %456 = vmatmul.mubr.f32.gmra.mrb[0].mxu0 %v301
        %v457 = vpop.f32.mrb[0].mxu0
        %v458 = vadd.f32 %v354, %v457
        %v459 = vpop.f32.mrb[0].mxu0
        %460 = vmatprep.mubr.f32.mxu0 0.0
        %461 = vmatmul.mubr.f32.gmra.mrb[0].mxu0 %v302
        %v462 = vpop.f32.mrb[0].mxu0
        %v463 = vadd.f32 %v359, %v462
        %v464 = vpop.f32.mrb[0].mxu0
        %465 = vmatprep.mubr.f32.mxu0 0.0
        %466 = vmatmul.mubr.f32.gmra.mrb[0].mxu0 %v303
        %v467 = vpop.f32.mrb[0].mxu0
        %v468 = vadd.f32 %v364, %v467
        %v469 = vpop.f32.mrb[0].mxu0
        %470 = vmatprep.mubr.f32.mxu0 0.0
        %471 = vmatmul.mubr.f32.gmra.mrb[0].mxu0 %v304
        %v472 = vpop.f32.mrb[0].mxu0
        %v473 = vadd.f32 %v369, %v472
        %v474 = vpop.f32.mrb[0].mxu0
        %475 = vmatprep.mubr.f32.mxu0 0.0
        %476 = vmatmul.mubr.f32.gmra.mrb[0].mxu0 %v305
        %v477 = vpop.f32.mrb[0].mxu0
        %v478 = vadd.f32 %v374, %v477
        %v479 = vpop.f32.mrb[0].mxu0
        %480 = vmatprep.mubr.f32.mxu0 0.0
        %481 = vmatmul.mubr.f32.gmra.mrb[0].mxu0 %v306
        %v482 = vpop.f32.mrb[0].mxu0
        %v483 = vadd.f32 %v379, %v482
        %v484 = vpop.f32.mrb[0].mxu0
        %485 = vdwg.mxu0
        %v486 = vmax.f32 %v448, 0.0
        %v487 = vmax.f32 %v453, 0.0
        %v488 = vmax.f32 %v458, 0.0
        %v489 = vmax.f32 %v463, 0.0
        %v490 = vmax.f32 %v468, 0.0
        %v491 = vmax.f32 %v473, 0.0
        %v492 = vmax.f32 %v478, 0.0
        %v493 = vmax.f32 %v483, 0.0
        %495 = vset.pattern.permute.xlu0 0
        %496 = vperm.xlu0 %495, %v319
        %v497 = vpop.permute.xlu0 %496
        %500 = vset.pattern.permute.xlu0 0
        %501 = vperm.xlu0 %500, %v320
        %v502 = vpop.permute.xlu0 %501
        %505 = vset.pattern.permute.xlu0 0
        %506 = vperm.xlu0 %505, %v321
        %v507 = vpop.permute.xlu0 %506
        %510 = vset.pattern.permute.xlu0 0
        %511 = vperm.xlu0 %510, %v322
        %v512 = vpop.permute.xlu0 %511
        %vm514 = vcmask 523264
        %v516 = vsel %vm514, %v315, 0
        %v519 = vsel %vm514, %v316, 0
        %v522 = vsel %vm514, %v317, 0
        %v525 = vsel %vm514, %v318, 0
        %527 = vmatprep.subr.mxu0 0.0
        %528 = vmatpush1.msra.mxu0 %v486
        %529 = vmatprep.subr.mxu0 0.0
        %530 = vmatpush1.msra.mxu0 %v487
        %531 = vmatprep.subr.mxu0 0.0
        %532 = vmatpush1.msra.mxu0 %v488
        %533 = vmatprep.subr.mxu0 0.0
        %534 = vmatpush1.msra.mxu0 %v489
        %535 = vmatprep.subr.mxu0 0.0
        %536 = vmatpush1.msra.mxu0 %v490
        %537 = vmatprep.subr.mxu0 0.0
        %538 = vmatpush1.msra.mxu0 %v491
        %539 = vmatprep.subr.mxu0 0.0
        %540 = vmatpush1.msra.mxu0 %v492
        %541 = vmatprep.subr.mxu0 0.0
        %542 = vmatpush1.msra.mxu0 %v493
        %543 = vmatprep.subr.mxu0 0.0
        %544 = vmatpush1.msra.mxu0 0.0
        %545 = vmatprep.subr.mxu0 0.0
        %546 = vmatpush1.msra.mxu0 0.0
        %547 = vmatprep.subr.mxu0 0.0
        %548 = vmatpush1.msra.mxu0 0.0
        %549 = vmatprep.subr.mxu0 0.0
        %550 = vmatpush1.msra.mxu0 0.0
        %551 = vmatprep.subr.mxu0 0.0
        %552 = vmatpush1.msra.mxu0 0.0
        %553 = vmatprep.subr.mxu0 0.0
        %554 = vmatpush1.msra.mxu0 0.0
        %555 = vmatprep.subr.mxu0 0.0
        %556 = vmatpush1.msra.mxu0 0.0
        %557 = vmatprep.subr.mxu0 0.0
        %558 = vmatpush1.msra.mxu0 0.0
        %559 = vmatprep.subr.mxu0 0.0
        %560 = vmatpush1.msra.mxu0 0.0
        %561 = vmatprep.subr.mxu0 0.0
        %562 = vmatpush1.msra.mxu0 0.0
        %563 = vmatprep.subr.mxu0 0.0
        %564 = vmatpush1.msra.mxu0 0.0
        %565 = vmatprep.subr.mxu0 0.0
        %566 = vmatpush1.msra.mxu0 0.0
        %567 = vmatprep.subr.mxu0 0.0
        %568 = vmatpush1.msra.mxu0 0.0
        %569 = vmatprep.subr.mxu0 0.0
        %570 = vmatpush1.msra.mxu0 0.0
        %571 = vmatprep.subr.mxu0 0.0
        %572 = vmatpush1.msra.mxu0 0.0
        %573 = vmatprep.subr.mxu0 0.0
        %574 = vmatpush1.msra.mxu0 0.0
        %575 = vmatprep.subr.mxu0 0.0
        %576 = vmatpush1.msra.mxu0 0.0
        %577 = vmatprep.subr.mxu0 0.0
        %578 = vmatpush1.msra.mxu0 0.0
        %579 = vmatprep.subr.mxu0 0.0
        %580 = vmatpush1.msra.mxu0 0.0
        %581 = vmatprep.subr.mxu0 0.0
        %582 = vmatpush1.msra.mxu0 0.0
        %583 = vmatprep.subr.mxu0 0.0
        %584 = vmatpush1.msra.mxu0 0.0
        %585 = vmatprep.subr.mxu0 0.0
        %586 = vmatpush1.msra.mxu0 0.0
        %587 = vmatprep.subr.mxu0 0.0
        %588 = vmatpush1.msra.mxu0 0.0
        %589 = vmatprep.subr.mxu0 0.0
        %590 = vmatpush1.msra.mxu0 0.0
        %591 = vmatprep.mubr.f32.mxu0 0.0
        %592 = vmatmul.mubr.f32.gmra.mrb[0].mxu0 %v516
        %v593 = vpop.f32.mrb[0].mxu0
        %v594 = vadd.f32 %v497, %v593
        %v595 = vpop.f32.mrb[0].mxu0
        %596 = vmatprep.mubr.f32.mxu0 0.0
        %597 = vmatmul.mubr.f32.gmra.mrb[0].mxu0 %v519
        %v598 = vpop.f32.mrb[0].mxu0
        %v599 = vadd.f32 %v502, %v598
        %v600 = vpop.f32.mrb[0].mxu0
        %601 = vmatprep.mubr.f32.mxu0 0.0
        %602 = vmatmul.mubr.f32.gmra.mrb[0].mxu0 %v522
        %v603 = vpop.f32.mrb[0].mxu0
        %v604 = vadd.f32 %v507, %v603
        %v605 = vpop.f32.mrb[0].mxu0
        %606 = vmatprep.mubr.f32.mxu0 0.0
        %607 = vmatmul.mubr.f32.gmra.mrb[0].mxu0 %v525
        %v608 = vpop.f32.mrb[0].mxu0
        %v609 = vadd.f32 %v512, %v608
        %v610 = vpop.f32.mrb[0].mxu0
        %611 = vdwg.mxu0
        %v612 = vmax.f32 %v594, 0.0
        %v613 = vmax.f32 %v599, 0.0
        %v614 = vmax.f32 %v604, 0.0
        %v615 = vmax.f32 %v609, 0.0
        %617 = vset.pattern.permute.xlu0 0
        %618 = vperm.xlu0 %617, %v324
        %v619 = vpop.permute.xlu0 %618
        %vm621 = vcmask 261120
        %v623 = vsel %vm621, %v323, 0
        %625 = vmatprep.subr.mxu0 0.0
        %626 = vmatpush1.msra.mxu0 %v612
        %627 = vmatprep.subr.mxu0 0.0
        %628 = vmatpush1.msra.mxu0 %v613
        %629 = vmatprep.subr.mxu0 0.0
        %630 = vmatpush1.msra.mxu0 %v614
        %631 = vmatprep.subr.mxu0 0.0
        %632 = vmatpush1.msra.mxu0 %v615
        %633 = vmatprep.subr.mxu0 0.0
        %634 = vmatpush1.msra.mxu0 0.0
        %635 = vmatprep.subr.mxu0 0.0
        %636 = vmatpush1.msra.mxu0 0.0
        %637 = vmatprep.subr.mxu0 0.0
        %638 = vmatpush1.msra.mxu0 0.0
        %639 = vmatprep.subr.mxu0 0.0
        %640 = vmatpush1.msra.mxu0 0.0
        %641 = vmatprep.subr.mxu0 0.0
        %642 = vmatpush1.msra.mxu0 0.0
        %643 = vmatprep.subr.mxu0 0.0
        %644 = vmatpush1.msra.mxu0 0.0
        %645 = vmatprep.subr.mxu0 0.0
        %646 = vmatpush1.msra.mxu0 0.0
        %647 = vmatprep.subr.mxu0 0.0
        %648 = vmatpush1.msra.mxu0 0.0
        %649 = vmatprep.subr.mxu0 0.0
        %650 = vmatpush1.msra.mxu0 0.0
        %651 = vmatprep.subr.mxu0 0.0
        %652 = vmatpush1.msra.mxu0 0.0
        %653 = vmatprep.subr.mxu0 0.0
        %654 = vmatpush1.msra.mxu0 0.0
        %655 = vmatprep.subr.mxu0 0.0
        %656 = vmatpush1.msra.mxu0 0.0
        %657 = vmatprep.subr.mxu0 0.0
        %658 = vmatpush1.msra.mxu0 0.0
        %659 = vmatprep.subr.mxu0 0.0
        %660 = vmatpush1.msra.mxu0 0.0
        %661 = vmatprep.subr.mxu0 0.0
        %662 = vmatpush1.msra.mxu0 0.0
        %663 = vmatprep.subr.mxu0 0.0
        %664 = vmatpush1.msra.mxu0 0.0
        %665 = vmatprep.subr.mxu0 0.0
        %666 = vmatpush1.msra.mxu0 0.0
        %667 = vmatprep.subr.mxu0 0.0
        %668 = vmatpush1.msra.mxu0 0.0
        %669 = vmatprep.subr.mxu0 0.0
        %670 = vmatpush1.msra.mxu0 0.0
        %671 = vmatprep.subr.mxu0 0.0
        %672 = vmatpush1.msra.mxu0 0.0
        %673 = vmatprep.subr.mxu0 0.0
        %674 = vmatpush1.msra.mxu0 0.0
        %675 = vmatprep.subr.mxu0 0.0
        %676 = vmatpush1.msra.mxu0 0.0
        %677 = vmatprep.subr.mxu0 0.0
        %678 = vmatpush1.msra.mxu0 0.0
        %679 = vmatprep.subr.mxu0 0.0
        %680 = vmatpush1.msra.mxu0 0.0
        %681 = vmatprep.subr.mxu0 0.0
        %682 = vmatpush1.msra.mxu0 0.0
        %683 = vmatprep.subr.mxu0 0.0
        %684 = vmatpush1.msra.mxu0 0.0
        %685 = vmatprep.subr.mxu0 0.0
        %686 = vmatpush1.msra.mxu0 0.0
        %687 = vmatprep.subr.mxu0 0.0
        %688 = vmatpush1.msra.mxu0 0.0
        %689 = vmatprep.mubr.f32.mxu0 0.0
        %690 = vmatmul.mubr.f32.gmra.mrb[0].mxu0 %v623
        %v691 = vpop.f32.mrb[0].mxu0
        %v692 = vadd.f32 %v619, %v691
        %v693 = vpop.f32.mrb[0].mxu0
        %694 = vdwg.mxu0
        %695 = vst [vmem:[%s296] sm:$0xf] %v692
        %v696 = vld [vmem:[%s266 + $0x80] sm:$0xff]
        %v697 = vld [vmem:[%s266 + $0x88] sm:$0xff]
        %v698 = vld [vmem:[%s266 + $0x90] sm:$0xff]
        %v699 = vld [vmem:[%s266 + $0x98] sm:$0xff]
        %v700 = vld [vmem:[%s266 + $0xa0] sm:$0xff]
        %v701 = vld [vmem:[%s266 + $0xa8] sm:$0xff]
        %v702 = vld [vmem:[%s266 + $0xb0] sm:$0xff]
        %v703 = vld [vmem:[%s266 + $0xb8] sm:$0xff]
        %v704 = vld [vmem:[%s266 + $0xc0] sm:$0xff]
        %v705 = vld [vmem:[%s266 + $0xc8] sm:$0xff]
        %v706 = vld [vmem:[%s266 + $0xd0] sm:$0xff]
        %v707 = vld [vmem:[%s266 + $0xd8] sm:$0xff]
        %v708 = vld [vmem:[%s266 + $0xe0] sm:$0xff]
        %v709 = vld [vmem:[%s266 + $0xe8] sm:$0xff]
        %v710 = vld [vmem:[%s266 + $0xf0] sm:$0xff]
        %v711 = vld [vmem:[%s266 + $0xf8] sm:$0xff]
        %712 = vmatprep.subr.mxu0 0.0
        %713 = vmatpush1.xpose.msra.mxu0 %v696
        %714 = vmatprep.subr.mxu0 0.0
        %715 = vmatpush1.xpose.msra.mxu0 %v697
        %716 = vmatprep.subr.mxu0 0.0
        %717 = vmatpush1.xpose.msra.mxu0 %v698
        %718 = vmatprep.subr.mxu0 0.0
        %719 = vmatpush1.xpose.msra.mxu0 %v699
        %720 = vmatprep.subr.mxu0 0.0
        %721 = vmatpush1.xpose.msra.mxu0 %v700
        %722 = vmatprep.subr.mxu0 0.0
        %723 = vmatpush1.xpose.msra.mxu0 %v701
        %724 = vmatprep.subr.mxu0 0.0
        %725 = vmatpush1.xpose.msra.mxu0 %v702
        %726 = vmatprep.subr.mxu0 0.0
        %727 = vmatpush1.xpose.msra.mxu0 %v703
        %728 = vmatprep.subr.mxu0 0.0
        %729 = vmatpush1.xpose.msra.mxu0 %v704
        %730 = vmatprep.subr.mxu0 0.0
        %731 = vmatpush1.xpose.msra.mxu0 %v705
        %732 = vmatprep.subr.mxu0 0.0
        %733 = vmatpush1.xpose.msra.mxu0 %v706
        %734 = vmatprep.subr.mxu0 0.0
        %735 = vmatpush1.xpose.msra.mxu0 %v707
        %736 = vmatprep.subr.mxu0 0.0
        %737 = vmatpush1.xpose.msra.mxu0 %v708
        %738 = vmatprep.subr.mxu0 0.0
        %739 = vmatpush1.xpose.msra.mxu0 %v709
        %740 = vmatprep.subr.mxu0 0.0
        %741 = vmatpush1.xpose.msra.mxu0 %v710
        %742 = vmatprep.subr.mxu0 0.0
        %743 = vmatpush1.xpose.msra.mxu0 %v711
        %744 = vmatprep.subr.mxu0 0.0
        %745 = vmatpush1.xpose.msra.mxu0 0.0
        %746 = vmatprep.subr.mxu0 0.0
        %747 = vmatpush1.xpose.msra.mxu0 0.0
        %748 = vmatprep.subr.mxu0 0.0
        %749 = vmatpush1.xpose.msra.mxu0 0.0
        %750 = vmatprep.subr.mxu0 0.0
        %751 = vmatpush1.xpose.msra.mxu0 0.0
        %752 = vmatprep.subr.mxu0 0.0
        %753 = vmatpush1.xpose.msra.mxu0 0.0
        %754 = vmatprep.subr.mxu0 0.0
        %755 = vmatpush1.xpose.msra.mxu0 0.0
        %756 = vmatprep.subr.mxu0 0.0
        %757 = vmatpush1.xpose.msra.mxu0 0.0
        %758 = vmatprep.subr.mxu0 0.0
        %759 = vmatpush1.xpose.msra.mxu0 0.0
        %760 = vmatprep.subr.mxu0 0.0
        %761 = vmatpush1.xpose.msra.mxu0 0.0
        %762 = vmatprep.subr.mxu0 0.0
        %763 = vmatpush1.xpose.msra.mxu0 0.0
        %764 = vmatprep.subr.mxu0 0.0
        %765 = vmatpush1.xpose.msra.mxu0 0.0
        %766 = vmatprep.subr.mxu0 0.0
        %767 = vmatpush1.xpose.msra.mxu0 0.0
        %768 = vmatprep.subr.mxu0 0.0
        %769 = vmatpush1.xpose.msra.mxu0 0.0
        %770 = vmatprep.subr.mxu0 0.0
        %771 = vmatpush1.xpose.msra.mxu0 0.0
        %772 = vmatprep.subr.mxu0 0.0
        %773 = vmatpush1.xpose.msra.mxu0 0.0
        %774 = vmatprep.subr.mxu0 0.0
        %775 = vmatpush1.xpose.msra.mxu0 0.0
        %776 = vmatprep.mubr.f32.mxu0 0.0
        %777 = vmatmul.mubr.f32.gmra.mrb[0].mxu0 %v299
        %v778 = vpop.f32.mrb[0].mxu0
        %v779 = vadd.f32 %v344, %v778
        %v780 = vpop.f32.mrb[0].mxu0
        %781 = vmatprep.mubr.f32.mxu0 0.0
        %782 = vmatmul.mubr.f32.gmra.mrb[0].mxu0 %v300
        %v783 = vpop.f32.mrb[0].mxu0
        %v784 = vadd.f32 %v349, %v783
        %v785 = vpop.f32.mrb[0].mxu0
        %786 = vmatprep.mubr.f32.mxu0 0.0
        %787 = vmatmul.mubr.f32.gmra.mrb[0].mxu0 %v301
        %v788 = vpop.f32.mrb[0].mxu0
        %v789 = vadd.f32 %v354, %v788
        %v790 = vpop.f32.mrb[0].mxu0
        %791 = vmatprep.mubr.f32.mxu0 0.0
        %792 = vmatmul.mubr.f32.gmra.mrb[0].mxu0 %v302
        %v793 = vpop.f32.mrb[0].mxu0
        %v794 = vadd.f32 %v359, %v793
        %v795 = vpop.f32.mrb[0].mxu0
        %796 = vmatprep.mubr.f32.mxu0 0.0
        %797 = vmatmul.mubr.f32.gmra.mrb[0].mxu0 %v303
        %v798 = vpop.f32.mrb[0].mxu0
        %v799 = vadd.f32 %v364, %v798
        %v800 = vpop.f32.mrb[0].mxu0
        %801 = vmatprep.mubr.f32.mxu0 0.0
        %802 = vmatmul.mubr.f32.gmra.mrb[0].mxu0 %v304
        %v803 = vpop.f32.mrb[0].mxu0
        %v804 = vadd.f32 %v369, %v803
        %v805 = vpop.f32.mrb[0].mxu0
        %806 = vmatprep.mubr.f32.mxu0 0.0
        %807 = vmatmul.mubr.f32.gmra.mrb[0].mxu0 %v305
        %v808 = vpop.f32.mrb[0].mxu0
        %v809 = vadd.f32 %v374, %v808
        %v810 = vpop.f32.mrb[0].mxu0
        %811 = vmatprep.mubr.f32.mxu0 0.0
        %812 = vmatmul.mubr.f32.gmra.mrb[0].mxu0 %v306
        %v813 = vpop.f32.mrb[0].mxu0
        %v814 = vadd.f32 %v379, %v813
        %v815 = vpop.f32.mrb[0].mxu0
        %816 = vdwg.mxu0
        %v817 = vmax.f32 %v779, 0.0
        %v818 = vmax.f32 %v784, 0.0
        %v819 = vmax.f32 %v789, 0.0
        %v820 = vmax.f32 %v794, 0.0
        %v821 = vmax.f32 %v799, 0.0
        %v822 = vmax.f32 %v804, 0.0
        %v823 = vmax.f32 %v809, 0.0
        %v824 = vmax.f32 %v814, 0.0
        %825 = vmatprep.subr.mxu0 0.0
        %826 = vmatpush1.msra.mxu0 %v817
        %827 = vmatprep.subr.mxu0 0.0
        %828 = vmatpush1.msra.mxu0 %v818
        %829 = vmatprep.subr.mxu0 0.0
        %830 = vmatpush1.msra.mxu0 %v819
        %831 = vmatprep.subr.mxu0 0.0
        %832 = vmatpush1.msra.mxu0 %v820
        %833 = vmatprep.subr.mxu0 0.0
        %834 = vmatpush1.msra.mxu0 %v821
        %835 = vmatprep.subr.mxu0 0.0
        %836 = vmatpush1.msra.mxu0 %v822
        %837 = vmatprep.subr.mxu0 0.0
        %838 = vmatpush1.msra.mxu0 %v823
        %839 = vmatprep.subr.mxu0 0.0
        %840 = vmatpush1.msra.mxu0 %v824
        %841 = vmatprep.subr.mxu0 0.0
        %842 = vmatpush1.msra.mxu0 0.0
        %843 = vmatprep.subr.mxu0 0.0
        %844 = vmatpush1.msra.mxu0 0.0
        %845 = vmatprep.subr.mxu0 0.0
        %846 = vmatpush1.msra.mxu0 0.0
        %847 = vmatprep.subr.mxu0 0.0
        %848 = vmatpush1.msra.mxu0 0.0
        %849 = vmatprep.subr.mxu0 0.0
        %850 = vmatpush1.msra.mxu0 0.0
        %851 = vmatprep.subr.mxu0 0.0
        %852 = vmatpush1.msra.mxu0 0.0
        %853 = vmatprep.subr.mxu0 0.0
        %854 = vmatpush1.msra.mxu0 0.0
        %855 = vmatprep.subr.mxu0 0.0
        %856 = vmatpush1.msra.mxu0 0.0
        %857 = vmatprep.subr.mxu0 0.0
        %858 = vmatpush1.msra.mxu0 0.0
        %859 = vmatprep.subr.mxu0 0.0
        %860 = vmatpush1.msra.mxu0 0.0
        %861 = vmatprep.subr.mxu0 0.0
        %862 = vmatpush1.msra.mxu0 0.0
        %863 = vmatprep.subr.mxu0 0.0
        %864 = vmatpush1.msra.mxu0 0.0
        %865 = vmatprep.subr.mxu0 0.0
        %866 = vmatpush1.msra.mxu0 0.0
        %867 = vmatprep.subr.mxu0 0.0
        %868 = vmatpush1.msra.mxu0 0.0
        %869 = vmatprep.subr.mxu0 0.0
        %870 = vmatpush1.msra.mxu0 0.0
        %871 = vmatprep.subr.mxu0 0.0
        %872 = vmatpush1.msra.mxu0 0.0
        %873 = vmatprep.subr.mxu0 0.0
        %874 = vmatpush1.msra.mxu0 0.0
        %875 = vmatprep.subr.mxu0 0.0
        %876 = vmatpush1.msra.mxu0 0.0
        %877 = vmatprep.subr.mxu0 0.0
        %878 = vmatpush1.msra.mxu0 0.0
        %879 = vmatprep.subr.mxu0 0.0
        %880 = vmatpush1.msra.mxu0 0.0
        %881 = vmatprep.subr.mxu0 0.0
        %882 = vmatpush1.msra.mxu0 0.0
        %883 = vmatprep.subr.mxu0 0.0
        %884 = vmatpush1.msra.mxu0 0.0
        %885 = vmatprep.subr.mxu0 0.0
        %886 = vmatpush1.msra.mxu0 0.0
        %887 = vmatprep.subr.mxu0 0.0
        %888 = vmatpush1.msra.mxu0 0.0
        %889 = vmatprep.mubr.f32.mxu0 0.0
        %890 = vmatmul.mubr.f32.gmra.mrb[0].mxu0 %v516
        %v891 = vpop.f32.mrb[0].mxu0
        %v892 = vadd.f32 %v497, %v891
        %v893 = vpop.f32.mrb[0].mxu0
        %894 = vmatprep.mubr.f32.mxu0 0.0
        %895 = vmatmul.mubr.f32.gmra.mrb[0].mxu0 %v519
        %v896 = vpop.f32.mrb[0].mxu0
        %v897 = vadd.f32 %v502, %v896
        %v898 = vpop.f32.mrb[0].mxu0
        %899 = vmatprep.mubr.f32.mxu0 0.0
        %900 = vmatmul.mubr.f32.gmra.mrb[0].mxu0 %v522
        %v901 = vpop.f32.mrb[0].mxu0
        %v902 = vadd.f32 %v507, %v901
        %v903 = vpop.f32.mrb[0].mxu0
        %904 = vmatprep.mubr.f32.mxu0 0.0
        %905 = vmatmul.mubr.f32.gmra.mrb[0].mxu0 %v525
        %v906 = vpop.f32.mrb[0].mxu0
        %v907 = vadd.f32 %v512, %v906
        %v908 = vpop.f32.mrb[0].mxu0
        %909 = vdwg.mxu0
        %v910 = vmax.f32 %v892, 0.0
        %v911 = vmax.f32 %v897, 0.0
        %v912 = vmax.f32 %v902, 0.0
        %v913 = vmax.f32 %v907, 0.0
        %914 = vmatprep.subr.mxu0 0.0
        %915 = vmatpush1.msra.mxu0 %v910
        %916 = vmatprep.subr.mxu0 0.0
        %917 = vmatpush1.msra.mxu0 %v911
        %918 = vmatprep.subr.mxu0 0.0
        %919 = vmatpush1.msra.mxu0 %v912
        %920 = vmatprep.subr.mxu0 0.0
        %921 = vmatpush1.msra.mxu0 %v913
        %922 = vmatprep.subr.mxu0 0.0
        %923 = vmatpush1.msra.mxu0 0.0
        %924 = vmatprep.subr.mxu0 0.0
        %925 = vmatpush1.msra.mxu0 0.0
        %926 = vmatprep.subr.mxu0 0.0
        %927 = vmatpush1.msra.mxu0 0.0
        %928 = vmatprep.subr.mxu0 0.0
        %929 = vmatpush1.msra.mxu0 0.0
        %930 = vmatprep.subr.mxu0 0.0
        %931 = vmatpush1.msra.mxu0 0.0
        %932 = vmatprep.subr.mxu0 0.0
        %933 = vmatpush1.msra.mxu0 0.0
        %934 = vmatprep.subr.mxu0 0.0
        %935 = vmatpush1.msra.mxu0 0.0
        %936 = vmatprep.subr.mxu0 0.0
        %937 = vmatpush1.msra.mxu0 0.0
        %938 = vmatprep.subr.mxu0 0.0
        %939 = vmatpush1.msra.mxu0 0.0
        %940 = vmatprep.subr.mxu0 0.0
        %941 = vmatpush1.msra.mxu0 0.0
        %942 = vmatprep.subr.mxu0 0.0
        %943 = vmatpush1.msra.mxu0 0.0
        %944 = vmatprep.subr.mxu0 0.0
        %945 = vmatpush1.msra.mxu0 0.0
        %946 = vmatprep.subr.mxu0 0.0
        %947 = vmatpush1.msra.mxu0 0.0
        %948 = vmatprep.subr.mxu0 0.0
        %949 = vmatpush1.msra.mxu0 0.0
        %950 = vmatprep.subr.mxu0 0.0
        %951 = vmatpush1.msra.mxu0 0.0
        %952 = vmatprep.subr.mxu0 0.0
        %953 = vmatpush1.msra.mxu0 0.0
        %954 = vmatprep.subr.mxu0 0.0
        %955 = vmatpush1.msra.mxu0 0.0
        %956 = vmatprep.subr.mxu0 0.0
        %957 = vmatpush1.msra.mxu0 0.0
        %958 = vmatprep.subr.mxu0 0.0
        %959 = vmatpush1.msra.mxu0 0.0
        %960 = vmatprep.subr.mxu0 0.0
        %961 = vmatpush1.msra.mxu0 0.0
        %962 = vmatprep.subr.mxu0 0.0
        %963 = vmatpush1.msra.mxu0 0.0
        %964 = vmatprep.subr.mxu0 0.0
        %965 = vmatpush1.msra.mxu0 0.0
        %966 = vmatprep.subr.mxu0 0.0
        %967 = vmatpush1.msra.mxu0 0.0
        %968 = vmatprep.subr.mxu0 0.0
        %969 = vmatpush1.msra.mxu0 0.0
        %970 = vmatprep.subr.mxu0 0.0
        %971 = vmatpush1.msra.mxu0 0.0
        %972 = vmatprep.subr.mxu0 0.0
        %973 = vmatpush1.msra.mxu0 0.0
        %974 = vmatprep.subr.mxu0 0.0
        %975 = vmatpush1.msra.mxu0 0.0
        %976 = vmatprep.subr.mxu0 0.0
        %977 = vmatpush1.msra.mxu0 0.0
        %978 = vmatprep.mubr.f32.mxu0 0.0
        %979 = vmatmul.mubr.f32.gmra.mrb[0].mxu0 %v623
        %v980 = vpop.f32.mrb[0].mxu0
        %v981 = vadd.f32 %v619, %v980
        %v982 = vpop.f32.mrb[0].mxu0
        %983 = vdwg.mxu0
        %984 = vst [vmem:[%s296 + $0x4] sm:$0xf] %v981
        %s985 = sand.u32 %s184, 1
        %s986 = scalar_lea.sflag [#allocation4], %s985
        %s987 = sand.u32 %s184, 1
        %s988 = smul.addr %s987, 8
        %s989 = scalar_lea.vmem [#allocation5], %s988
        // Predicated region
        $region53: #{tpu_custom_call.1} parent=47 // pred_check
          %p990 = pneg %p194
        $region54: #{tpu_custom_call.1} parent=47 // pred_check_branch
          %992 = sbr.rel (%p990) target = $region56
        $region55: #{tpu_custom_call.1} parent=47 // pred_region
          %s993 = smul.u32 2, %s24
          %s995 = ssub.s32 128, 128
          %996 = vsyncadd %s986, %s995
          %s997 = smul.addr %s993, 64
          %s998 = scalar_lea.hbm %s7, %s997
          %s1000 = sshll.u32 %s989, 4
          %s1001 = int_to_ptr.vmem [resolvable:$true] %s1000
          %1003 = dma.vmem_to_hbm [thread:$0]  %s1001, 128, %s998, %s986
        $region56: #{tpu_custom_call.1} parent=47 // pred_fallthru
          _
      $region48: #{tpu_custom_call.1} parent=5 // pred_fallthru
        _
      %p1004 = scmp.le.s32.totalorder 2, %s19
      // Predicated region
      $region57: #{tpu_custom_call.1} parent=5 // pred_check
        %p1005 = pneg %p1004
      $region58: #{tpu_custom_call.1} parent=5 // pred_check_branch
        %1007 = sbr.rel (%p1005) target = $region60
      $region59: #{tpu_custom_call.1} parent=5 // pred_region
        %s1008 = ssub.s32 %s19, 2
        // Predicated region
        $region61: #{tpu_custom_call.1} parent=59 // pred_check
          %p1009 = pneg %p200
        $region62: #{tpu_custom_call.1} parent=59 // pred_check_branch
          %1011 = sbr.rel (%p1009) target = $region64
        $region63: #{tpu_custom_call.1} parent=59 // pred_region
          %s1012 = sand.u32 %s185, 1
          %s1013 = scalar_lea.sflag [#allocation4], %s1012
          %s1014 = sand.u32 %s185, 1
          %s1015 = smul.addr %s1014, 8
          %s1016 = scalar_lea.vmem [#allocation5], %s1015
          %1017 = dma.done %s1013, 128
        $region64: #{tpu_custom_call.1} parent=59 // pred_fallthru
          _
      $region60: #{tpu_custom_call.1} parent=5 // pred_fallthru
        _
    $region6: #{tpu_custom_call.1} parent=1 // loop_footer
      %s23 = sadd.s32 1, %s19
    $region7: #{tpu_custom_call.1} parent=1 // loop_footer_branch
      %18 = sbr.rel target = $region3
    $region8: #{tpu_custom_call.1} parent=1 // loop_exit
      _
    %1018 = vsyncpa [#allocation3], 1
    %s1019 = scalar_lea.sflag [#allocation3], 1
    %1020 = vsyncpa %s1019, 1
    %1021 = vsyncpa [#allocation4], 1
    %s1022 = scalar_lea.sflag [#allocation4], 1
    %1023 = vsyncpa %s1022, 1

</llo_original>
